<compile_context>
chip_gen: v5e
topology: v5e:2x2
jax: 0.10.0
libtpu: 0.0.40
codegen_flags: <defaults>
</compile_context>

<pallas_src>
import jax
import jax.numpy as jnp
from jax import lax
from jax.experimental import pallas as pl
from jax.experimental.pallas import tpu as pltpu

HALO_ROWS = 8  # sublane-granular halo block along the tiled (phase-row) axis


# ----------------------------------------------------------------------------- kernel
def downsample_kernel(x_ref, xh_ref, w_ref, o_ref):
    """Fused 3x3 conv + PixelUnshuffle(2) for one (batch, H-tile) block.

    x_ref : (1, TH2, Wp2, 4*Cin)   phase-decomposed padded input rows of this tile
    xh_ref: (1, HALO, Wp2, 4*Cin)  next phase rows (only row 0 used: the +1 halo row)
    w_ref : (4, 4*Cin, 4*Cout)     fused conv+unshuffle weights, index = dby*2+dbx
    o_ref : (1, TH2, W2, 4*Cout)   pixel-unshuffled output tile (lane-dense last dim)
    """
    th2 = o_ref.shape[1]
    w2 = o_ref.shape[2]
    n_out = o_ref.shape[3]
    c4 = x_ref.shape[3]

    # (TH2 + 1, Wp2, 4*Cin) window = this tile's rows + one halo row from the next block.
    x_win = jnp.concatenate([x_ref[0], xh_ref[0, 0:1]], axis=0)

    # 4 accumulated MXU matmuls, one per 2x2 block shift (dby, dbx).
    # Each has K = 4*Cin and N = 4*Cout (vs. 9 matmuls of K=Cin, N=Cout before).
    acc = jnp.zeros((th2 * w2, n_out), jnp.float32)
    for t, (dby, dbx) in enumerate(((0, 0), (0, 1), (1, 0), (1, 1))):
        patch = x_win[dby:dby + th2, dbx:dbx + w2, :].reshape(th2 * w2, c4)
        acc = acc + jnp.dot(patch, w_ref[t], preferred_element_type=jnp.float32)

    o_ref[...] = acc.reshape(1, th2, w2, n_out).astype(o_ref.dtype)


# ------------------------------------------------------------------------ weight fusion
def build_fused_weight(w_oihw):
    """OIHW (Cout, Cin, 3, 3) -> fused conv+PixelUnshuffle(2) weight (4, 4*Cin, 4*Cout).

    w_fused[dby*2+dbx, (ph*2+pw)*Cin + ci, co*4 + i*2 + j] =
        W[co, ci, 2*dby+ph-i, 2*dbx+pw-j]    (0 if the tap falls outside the 3x3 kernel)
    which makes   out[b, co*4+i*2+j, h2, w2] == PixelUnshuffle(conv3x3(x))  exactly.
    """
    c_out, c_in = w_oihw.shape[0], w_oihw.shape[1]
    zeros = jnp.zeros((c_in, c_out), w_oihw.dtype)
    groups = []
    for dby in range(2):
        for dbx in range(2):
            phase_blocks = []
            for ph in range(2):
                for pw in range(2):
                    taps = []
                    for i in range(2):
                        for j in range(2):
                            dy = 2 * dby + ph - i
                            dx = 2 * dbx + pw - j
                            if 0 <= dy <= 2 and 0 <= dx <= 2:
                                taps.append(jnp.transpose(w_oihw[:, :, dy, dx]))  # (Cin, Cout)
                            else:
                                taps.append(zeros)
                    blk = jnp.stack(taps, axis=-1)                 # (Cin, Cout, 4), last = i*2+j
                    phase_blocks.append(blk.reshape(c_in, 4 * c_out))
            groups.append(jnp.concatenate(phase_blocks, axis=0))   # (4*Cin, 4*Cout)
    return jnp.stack(groups, axis=0)                               # (4, 4*Cin, 4*Cout)


# ---------------------------------------------------------------------------- wrapper
def _pick_tile_h2(h2, wp2, c4in, budget_bytes=2 * 1024 * 1024):
    """Largest multiple-of-8 divisor of h2 whose input tile fits the VMEM budget."""
    best = None
    for d in range(HALO_ROWS, h2 + 1, HALO_ROWS):
        if h2 % d == 0 and d * wp2 * c4in * 4 <= budget_bytes:
            best = d
    return best if best is not None else h2


def downsample_forward(x_nchw, w_oihw, tile_h2=None):
    """Equivalent of Downsample(n_feat).forward(x).  x: (B, n_feat, H, W) NCHW."""
    B, c_in, H, W = x_nchw.shape
    c_out = w_oihw.shape[0]
    assert H % 2 == 0 and W % 2 == 0, "PixelUnshuffle(2) needs even spatial dims"
    h2, w2 = H // 2, W // 2
    c4in, n_out = 4 * c_in, 4 * c_out

    # --- layout plumbing (XLA): NCHW -> NHWC, pad by 1, 2x2 phase decomposition ----
    x_nhwc = jnp.transpose(x_nchw, (0, 2, 3, 1))
    x_pad = jnp.pad(x_nhwc, ((0, 0), (1, 1), (1, 1), (0, 0)))
    hp2, wp2 = h2 + 1, w2 + 1
    x_ph = x_pad.reshape(B, hp2, 2, wp2, 2, c_in)
    x_ph = jnp.transpose(x_ph, (0, 1, 3, 2, 4, 5)).reshape(B, hp2, wp2, c4in)

    # --- spatial tile along the phase-row (H/2) axis -------------------------------
    if tile_h2 is None:
        tile_h2 = _pick_tile_h2(h2, wp2, c4in)
    assert h2 % tile_h2 == 0, "tile_h2 must divide H//2"
    n_h = h2 // tile_h2
    halo_blk = HALO_ROWS if tile_h2 % HALO_ROWS == 0 else tile_h2
    halo_stride = tile_h2 // halo_blk

    # Pad phase rows so every halo block is fully in bounds (padding rows never used).
    rows_needed = n_h * tile_h2 + halo_blk
    x_ph = jnp.pad(x_ph, ((0, 0), (0, rows_needed - hp2), (0, 0), (0, 0)))

    w_fused = build_fused_weight(w_oihw)                        # (4, 4*Cin, 4*Cout)

    flops = 2 * B * h2 * w2 * (16 * c_in) * n_out
    bytes_accessed = ((x_ph.size + w_fused.size) * 4) + (B * h2 * w2 * n_out * 4)

    y = pl.pallas_call(
        downsample_kernel,
        out_shape=jax.ShapeDtypeStruct((B, h2, w2, n_out), x_nchw.dtype),
        grid_spec=pltpu.PrefetchScalarGridSpec(
            num_scalar_prefetch=0,
            grid=(B, n_h),
            in_specs=[
                # main tile rows [i*TH2, (i+1)*TH2)
                pl.BlockSpec((1, tile_h2, wp2, c4in), lambda b, i: (b, i, 0, 0)),
                # halo block starting at row (i+1)*TH2 (only its first row is used)
                pl.BlockSpec((1, halo_blk, wp2, c4in),
                             lambda b, i: (b, (i + 1) * halo_stride, 0, 0)),
                # fused weights, resident across the whole grid
                pl.BlockSpec((4, c4in, n_out), lambda b, i: (0, 0, 0)),
            ],
            out_specs=pl.BlockSpec((1, tile_h2, w2, n_out), lambda b, i: (b, i, 0, 0)),
        ),
        compiler_params=pltpu.CompilerParams(
            dimension_semantics=("parallel", "parallel"),   # batch + H-tiles -> 2-TC on v7x
            vmem_limit_bytes=32 * 1024 * 1024,
        ),
        cost_estimate=pl.CostEstimate(flops=flops, transcendentals=0,
                                      bytes_accessed=bytes_accessed),
    )(x_ph, x_ph, w_fused)

    # Kernel already emits PixelUnshuffle channel order (co*4 + i*2 + j); just go NCHW.
    return jnp.transpose(y, (0, 3, 1, 2))


# --------------------------------------------------------------------------- reference
def pixel_unshuffle_nchw(x, r):
    B, C, H, W = x.shape
    x = x.reshape(B, C, H // r, r, W // r, r)
    x = jnp.transpose(x, (0, 1, 3, 5, 2, 4))
    return x.reshape(B, C * r * r, H // r, W // r)


if __name__ == "__main__":
    key = jax.random.PRNGKey(0)
    k_x, k_w = jax.random.split(key)

    B, n_feat, H, W = 2, 4, 32, 32
    x = jax.random.normal(k_x, (B, n_feat, H, W), dtype=jnp.float32)
    # Conv2d(n_feat, n_feat//2, 3, bias=False) weight: (Cout, Cin, 3, 3)
    w = jax.random.normal(k_w, (n_feat // 2, n_feat, 3, 3), dtype=jnp.float32) * 0.1

    fwd = jax.jit(downsample_forward, static_argnames=("tile_h2",))
    out = fwd(x, w, tile_h2=8)          # 2 H-tiles -> exercises the halo path
    out = jax.block_until_ready(out)
    assert out.shape == (B, 2 * n_feat, H // 2, W // 2), out.shape

    # Reference: XLA conv + pixel-unshuffle
    conv_ref = lax.conv_general_dilated(
        x, w, window_strides=(1, 1), padding=((1, 1), (1, 1)),
        dimension_numbers=("NCHW", "OIHW", "NCHW"))
    ref = pixel_unshuffle_nchw(conv_ref, 2)
    assert jnp.allclose(out, ref, atol=5e-4, rtol=5e-4), \
        float(jnp.max(jnp.abs(out - ref)))

    print("KERNEL_OK")
</pallas_src>

<mosaic_0001>
module attributes {stable_mosaic.version = 11 : i64} {
  func.func @downsample_kernel(%arg0: i32, %arg1: i32, %arg2: memref<1x8x17x16xf32, #tpu.memory_space<vmem>>, %arg3: memref<1x8x17x16xf32, #tpu.memory_space<vmem>>, %arg4: memref<4x16x8xf32, #tpu.memory_space<vmem>>, %arg5: memref<1x8x16x8xf32, #tpu.memory_space<vmem>>) attributes {dimension_semantics = [#tpu.dimension_semantics<parallel>, #tpu.dimension_semantics<parallel>], iteration_bounds = array<i64: 2, 2>, scalar_prefetch = 0 : i64, scratch_operands = 0 : i64, tpu.core_type = #tpu.core_type<tc>, window_params = [{transform_indices = @transform_0, window_bounds = array<i64: 1, 8, 17, 16>}, {transform_indices = @transform_1, window_bounds = array<i64: 1, 8, 17, 16>}, {pipeline_mode = #tpu.pipeline_mode<synchronous>, transform_indices = @transform_2, window_bounds = array<i64: 4, 16, 8>}, {transform_indices = @transform_3, window_bounds = array<i64: 1, 8, 16, 8>}]} {
    %c0 = arith.constant 0 : index
    %c0_0 = arith.constant 0 : index
    %c0_1 = arith.constant 0 : index
    %c0_2 = arith.constant 0 : index
    %0 = vector.load %arg2[%c0, %c0_0, %c0_1, %c0_2] : memref<1x8x17x16xf32, #tpu.memory_space<vmem>>, vector<1x8x17x16xf32>
    %1 = vector.shape_cast %0 : vector<1x8x17x16xf32> to vector<8x17x16xf32>
    %c0_3 = arith.constant 0 : index
    %c0_4 = arith.constant 0 : index
    %c0_5 = arith.constant 0 : index
    %c0_6 = arith.constant 0 : index
    %2 = vector.load %arg3[%c0_3, %c0_4, %c0_5, %c0_6] : memref<1x8x17x16xf32, #tpu.memory_space<vmem>>, vector<1x1x17x16xf32>
    %3 = vector.shape_cast %2 : vector<1x1x17x16xf32> to vector<1x17x16xf32>
    %4 = tpu.concatenate %1, %3 in 0 : vector<8x17x16xf32>, vector<1x17x16xf32> -> vector<9x17x16xf32>
    %cst = arith.constant 0.000000e+00 : f32
    %5 = vector.broadcast %cst : f32 to vector<128x8xf32>
    %6 = vector.extract_strided_slice %4 {offsets = [0, 0, 0], sizes = [8, 16, 16], strides = [1, 1, 1]} : vector<9x17x16xf32> to vector<8x16x16xf32>
    %7 = vector.shape_cast %6 : vector<8x16x16xf32> to vector<128x16xf32>
    %c0_7 = arith.constant 0 : index
    %c0_8 = arith.constant 0 : index
    %c0_9 = arith.constant 0 : index
    %8 = vector.load %arg4[%c0_7, %c0_8, %c0_9] : memref<4x16x8xf32, #tpu.memory_space<vmem>>, vector<1x16x8xf32>
    %9 = vector.shape_cast %8 : vector<1x16x8xf32> to vector<16x8xf32>
    %cst_10 = arith.constant dense<0.000000e+00> : vector<128x8xf32>
    %10 = tpu.matmul %7, %9, %cst_10 {dimension_numbers = #tpu.dot_dimension_numbers<[1], [0], [0], [1], [0, 0, 1, 1], [], []>} : vector<128x16xf32>, vector<16x8xf32>, vector<128x8xf32> -> vector<128x8xf32>
    %11 = arith.addf %5, %10 : vector<128x8xf32>
    %12 = vector.extract_strided_slice %4 {offsets = [0, 1, 0], sizes = [8, 16, 16], strides = [1, 1, 1]} : vector<9x17x16xf32> to vector<8x16x16xf32>
    %13 = vector.shape_cast %12 : vector<8x16x16xf32> to vector<128x16xf32>
    %c1 = arith.constant 1 : index
    %c0_11 = arith.constant 0 : index
    %c0_12 = arith.constant 0 : index
    %14 = vector.load %arg4[%c1, %c0_11, %c0_12] : memref<4x16x8xf32, #tpu.memory_space<vmem>>, vector<1x16x8xf32>
    %15 = vector.shape_cast %14 : vector<1x16x8xf32> to vector<16x8xf32>
    %cst_13 = arith.constant dense<0.000000e+00> : vector<128x8xf32>
    %16 = tpu.matmul %13, %15, %cst_13 {dimension_numbers = #tpu.dot_dimension_numbers<[1], [0], [0], [1], [0, 0, 1, 1], [], []>} : vector<128x16xf32>, vector<16x8xf32>, vector<128x8xf32> -> vector<128x8xf32>
    %17 = arith.addf %11, %16 : vector<128x8xf32>
    %18 = vector.extract_strided_slice %4 {offsets = [1, 0, 0], sizes = [8, 16, 16], strides = [1, 1, 1]} : vector<9x17x16xf32> to vector<8x16x16xf32>
    %19 = vector.shape_cast %18 : vector<8x16x16xf32> to vector<128x16xf32>
    %c2 = arith.constant 2 : index
    %c0_14 = arith.constant 0 : index
    %c0_15 = arith.constant 0 : index
    %20 = vector.load %arg4[%c2, %c0_14, %c0_15] : memref<4x16x8xf32, #tpu.memory_space<vmem>>, vector<1x16x8xf32>
    %21 = vector.shape_cast %20 : vector<1x16x8xf32> to vector<16x8xf32>
    %cst_16 = arith.constant dense<0.000000e+00> : vector<128x8xf32>
    %22 = tpu.matmul %19, %21, %cst_16 {dimension_numbers = #tpu.dot_dimension_numbers<[1], [0], [0], [1], [0, 0, 1, 1], [], []>} : vector<128x16xf32>, vector<16x8xf32>, vector<128x8xf32> -> vector<128x8xf32>
    %23 = arith.addf %17, %22 : vector<128x8xf32>
    %24 = vector.extract_strided_slice %4 {offsets = [1, 1, 0], sizes = [8, 16, 16], strides = [1, 1, 1]} : vector<9x17x16xf32> to vector<8x16x16xf32>
    %25 = vector.shape_cast %24 : vector<8x16x16xf32> to vector<128x16xf32>
    %c3 = arith.constant 3 : index
    %c0_17 = arith.constant 0 : index
    %c0_18 = arith.constant 0 : index
    %26 = vector.load %arg4[%c3, %c0_17, %c0_18] : memref<4x16x8xf32, #tpu.memory_space<vmem>>, vector<1x16x8xf32>
    %27 = vector.shape_cast %26 : vector<1x16x8xf32> to vector<16x8xf32>
    %cst_19 = arith.constant dense<0.000000e+00> : vector<128x8xf32>
    %28 = tpu.matmul %25, %27, %cst_19 {dimension_numbers = #tpu.dot_dimension_numbers<[1], [0], [0], [1], [0, 0, 1, 1], [], []>} : vector<128x16xf32>, vector<16x8xf32>, vector<128x8xf32> -> vector<128x8xf32>
    %29 = arith.addf %23, %28 : vector<128x8xf32>
    %30 = vector.shape_cast %29 : vector<128x8xf32> to vector<1x8x16x8xf32>
    %c0_20 = arith.constant 0 : index
    %c0_21 = arith.constant 0 : index
    %c0_22 = arith.constant 0 : index
    %c0_23 = arith.constant 0 : index
    %31 = vector.load %arg5[%c0_20, %c0_21, %c0_22, %c0_23] : memref<1x8x16x8xf32, #tpu.memory_space<vmem>>, vector<1x8x16x8xf32>
    tpu.vector_store %arg5[%c0_20, %c0_21, %c0_22, %c0_23], %30 {strides = array<i32>} : memref<1x8x16x8xf32, #tpu.memory_space<vmem>>, vector<1x8x16x8xf32>,
    return
  }
  func.func @transform_0(%arg0: i32, %arg1: i32) -> (i32, i32, i32, i32) {
    %c0_i32 = arith.constant 0 : i32
    %c0_i32_0 = arith.constant 0 : i32
    %c0_i32_1 = arith.constant 0 : i32
    return %arg0, %arg1, %c0_i32, %c0_i32_0 : i32, i32, i32, i32
  }
  func.func @transform_1(%arg0: i32, %arg1: i32) -> (i32, i32, i32, i32) {
    %c1_i32 = arith.constant 1 : i32
    %0 = arith.addi %arg1, %c1_i32 : i32
    %c1_i32_0 = arith.constant 1 : i32
    %1 = arith.muli %0, %c1_i32_0 : i32
    %c0_i32 = arith.constant 0 : i32
    %c0_i32_1 = arith.constant 0 : i32
    %c0_i32_2 = arith.constant 0 : i32
    return %arg0, %1, %c0_i32, %c0_i32_1 : i32, i32, i32, i32
  }
  func.func @transform_2(%arg0: i32, %arg1: i32) -> (i32, i32, i32) {
    %c0_i32 = arith.constant 0 : i32
    %c0_i32_0 = arith.constant 0 : i32
    %c0_i32_1 = arith.constant 0 : i32
    %c0_i32_2 = arith.constant 0 : i32
    return %c0_i32, %c0_i32_0, %c0_i32_1 : i32, i32, i32
  }
  func.func @transform_3(%arg0: i32, %arg1: i32) -> (i32, i32, i32, i32) {
    %c0_i32 = arith.constant 0 : i32
    %c0_i32_0 = arith.constant 0 : i32
    %c0_i32_1 = arith.constant 0 : i32
    return %arg0, %arg1, %c0_i32, %c0_i32_0 : i32, i32, i32, i32
  }
}

</mosaic_0001>

<llo_original>
// kernel: downsample_forward.1
$region0: #{downsample_forward.1}
  #allocation0 [shape = 'u32[]', space=smem, size = 0x4, offset = 0x4, fixed_abs, tag = 'smem constant byte address 0x4 - core index']
  #allocation1 [shape = 'u32[72,128]{1,0:T(1,128)}', space=vmem, size = 0x9000, scoped, tag = 'internal scratch']
  %s0 = inlined_call_operand.vmem [shape: f32[2,24,17,16], index: 0, kind: input, shape index: {}, may-alias: {0,1}]
  %s1 = inlined_call_operand.vmem [shape: f32[2,24,17,16], index: 1, kind: input, shape index: {}, may-alias: {0,1}]
  %s2 = inlined_call_operand.vmem [shape: f32[4,16,8], index: 2, kind: input, shape index: {}]
  %s3 = inlined_call_operand.vmem [shape: f32[2,16,16,8], index: 3, kind: output, shape index: {}]
  %s4 = sld [smem:[#allocation0]]
  $region45: #{downsample_forward.1} parent=0
    _
  %s6 = ssub.s32 1, %s4
  %s7 = scalar_select 0, %s6, %s4
  loop: start=0, step=1, limit=6
  $region2: #{downsample_forward.1} parent=0 // loop_pre_header
    _
  $region3: #{downsample_forward.1} parent=0 // loop_header
    %s9 = sphi 0, %s13
    %p10 = scmp.ge.s32.totalorder %s9, 6
    %s16 = sphi 0, %s28
    %s17 = sphi 0, %s24
    %s18 = sphi 0, %s16
    %s19 = sphi 0, %s17
    %s20 = sphi 0, %s18
    %s21 = sphi 0, %s19
    %s33 = sphi 0, %s35
    %s36 = sphi 0, %s33
    %s37 = sphi 0, %s36
    %s53 = sphi 0, %s37
    %s63 = sphi 0, %s65
    %s66 = sphi 0, %s63
    %s67 = sphi 0, %s66
    %s83 = sphi 0, %s67
    %s87 = sphi 0, %s87
    %s89 = sphi 0, %s87
    %s90 = sphi 0, %s89
    %s104 = sphi 0, %s90
    %s112 = sphi 0, %s114
    %s115 = sphi 0, %s112
    %s116 = sphi 0, %s115
    %s132 = sphi 0, %s116
  $region4: #{downsample_forward.1} parent=0 // loop_header_branch
    %12 = sbr.rel (%p10) target = $region8
  $region5: #{downsample_forward.1} parent=0 // loop_body
    %s14 = ssub.s32 %s9, 1
    %s15 = ssub.s32 %s9, 2
    %s22 = sadd.s32 1, %s17
    %p23 = scmp.ge.s32.totalorder %s22, 2
    %s24 = scalar_select %p23, 0, %s22
    %s25 = sadd.s32 1, %s16
    %s26 = scalar_select %p23, %s25, %s16
    %p27 = scmp.ge.s32.totalorder %s26, 2
    %s28 = scalar_select %p27, 0, %s26
    %s29 = ssub.s32 %s16, %s28
    %s30 = ssub.s32 %s17, %s24
    %s31 = sor.u32 %s29, %s30
    %p32 = scmp.eq.s32.totalorder %s31, 0
    %s34 = sadd.s32 %s33, 1
    %s35 = scalar_select %p32, %s33, %s34
    %p38 = pneg %p32
    %p39 = scmp.eq.s32.totalorder %s9, 3
    %p40 = por %p38, %p39
    %p41 = scmp.ne.s32.totalorder %s33, %s36
    %p42 = scmp.eq.s32.totalorder %s9, 0
    %p43 = por %p41, %p42
    %p44 = scmp.ne.s32.totalorder %s33, %s36
    %p45 = scmp.eq.s32.totalorder %s14, 3
    %p46 = por %p44, %p45
    %p47 = scmp.ne.s32.totalorder %s36, %s37
    %p48 = scmp.eq.s32.totalorder %s14, 0
    %p49 = por %p47, %p48
    %p50 = scmp.ne.s32.totalorder %s36, %s37
    %p51 = scmp.eq.s32.totalorder %s15, 3
    %p52 = por %p50, %p51
    %p54 = scmp.ne.s32.totalorder %s37, %s53
    %p55 = scmp.eq.s32.totalorder %s15, 0
    %p56 = por %p54, %p55
    %s57 = sadd.s32 %s17, 1
    %s58 = sadd.s32 %s24, 1
    %s59 = ssub.s32 %s16, %s28
    %s60 = ssub.s32 %s57, %s58
    %s61 = sor.u32 %s59, %s60
    %p62 = scmp.eq.s32.totalorder %s61, 0
    %s64 = sadd.s32 %s63, 1
    %s65 = scalar_select %p62, %s63, %s64
    %p68 = pneg %p62
    %p69 = scmp.eq.s32.totalorder %s9, 3
    %p70 = por %p68, %p69
    %p71 = scmp.ne.s32.totalorder %s63, %s66
    %p72 = scmp.eq.s32.totalorder %s9, 0
    %p73 = por %p71, %p72
    %p74 = scmp.ne.s32.totalorder %s63, %s66
    %p75 = scmp.eq.s32.totalorder %s14, 3
    %p76 = por %p74, %p75
    %p77 = scmp.ne.s32.totalorder %s66, %s67
    %p78 = scmp.eq.s32.totalorder %s14, 0
    %p79 = por %p77, %p78
    %p80 = scmp.ne.s32.totalorder %s66, %s67
    %p81 = scmp.eq.s32.totalorder %s15, 3
    %p82 = por %p80, %p81
    %p84 = scmp.ne.s32.totalorder %s67, %s83
    %p85 = scmp.eq.s32.totalorder %s15, 0
    %p86 = por %p84, %p85
    %s88 = sadd.s32 %s87, 1
    %p91 = scmp.eq.s32.totalorder %s9, 3
    %p92 = scmp.ne.s32.totalorder %s87, %s89
    %p93 = scmp.eq.s32.totalorder %s9, 0
    %p94 = por %p92, %p93
    %p95 = scmp.ne.s32.totalorder %s87, %s89
    %p96 = scmp.eq.s32.totalorder %s14, 3
    %p97 = por %p95, %p96
    %p98 = scmp.ne.s32.totalorder %s89, %s90
    %p99 = scmp.eq.s32.totalorder %s14, 0
    %p100 = por %p98, %p99
    %p101 = scmp.ne.s32.totalorder %s89, %s90
    %p102 = scmp.eq.s32.totalorder %s15, 3
    %p103 = por %p101, %p102
    %p105 = scmp.ne.s32.totalorder %s90, %s104
    %p106 = scmp.eq.s32.totalorder %s15, 0
    %p107 = por %p105, %p106
    %s108 = ssub.s32 %s16, %s28
    %s109 = ssub.s32 %s17, %s24
    %s110 = sor.u32 %s108, %s109
    %p111 = scmp.eq.s32.totalorder %s110, 0
    %s113 = sadd.s32 %s112, 1
    %s114 = scalar_select %p111, %s112, %s113
    %p117 = pneg %p111
    %p118 = scmp.eq.s32.totalorder %s9, 3
    %p119 = por %p117, %p118
    %p120 = scmp.ne.s32.totalorder %s112, %s115
    %p121 = scmp.eq.s32.totalorder %s9, 0
    %p122 = por %p120, %p121
    %p123 = scmp.ne.s32.totalorder %s112, %s115
    %p124 = scmp.eq.s32.totalorder %s14, 3
    %p125 = por %p123, %p124
    %p126 = scmp.ne.s32.totalorder %s115, %s116
    %p127 = scmp.eq.s32.totalorder %s14, 0
    %p128 = por %p126, %p127
    %p129 = scmp.ne.s32.totalorder %s115, %s116
    %p130 = scmp.eq.s32.totalorder %s15, 3
    %p131 = por %p129, %p130
    %p133 = scmp.ne.s32.totalorder %s116, %s132
    %p134 = scmp.eq.s32.totalorder %s15, 0
    %p135 = por %p133, %p134
    %p136 = scmp.le.s32.totalorder 1, %s9
    %p137 = scmp.lt.s32.totalorder %s9, 5
    %p138 = pnand %p136, %p137
    %p139 = pneg %p138
    // Predicated region
    $region9: #{downsample_forward.1} parent=5 // pred_check
      _
    $region10: #{downsample_forward.1} parent=5 // pred_check_branch
      %141 = sbr.rel (%p138) target = $region12
    $region11: #{downsample_forward.1} parent=5 // pred_region
      %s142 = ssub.s32 %s9, 1
      // Predicated region
      $region13: #{downsample_forward.1} parent=11 // pred_check
        %p143 = pneg %p100
      $region14: #{downsample_forward.1} parent=11 // pred_check_branch
        %145 = sbr.rel (%p143) target = $region16
      $region15: #{downsample_forward.1} parent=11 // pred_region
        _
      $region16: #{downsample_forward.1} parent=11 // pred_fallthru
        _
    $region12: #{downsample_forward.1} parent=5 // pred_fallthru
      _
    %p146 = scmp.lt.s32.totalorder %s9, 4
    // Predicated region
    $region17: #{downsample_forward.1} parent=5 // pred_check
      %p147 = pneg %p146
    $region18: #{downsample_forward.1} parent=5 // pred_check_branch
      %149 = sbr.rel (%p147) target = $region20
    $region19: #{downsample_forward.1} parent=5 // pred_region
      // Predicated region
      $region21: #{downsample_forward.1} parent=19 // pred_check
        %p150 = pneg %p43
      $region22: #{downsample_forward.1} parent=19 // pred_check_branch
        %152 = sbr.rel (%p150) target = $region24
      $region23: #{downsample_forward.1} parent=19 // pred_region
        %s153 = smul.u32 8, %s17
        %p154 = scmp.lt.s32.totalorder %s16, 1
        %s155 = scalar_select %p154, %s16, 1
        %p156 = scmp.lt.s32.totalorder %s153, 23
        %s157 = scalar_select %p156, %s153, 23
        %s158 = smul.addr %s157, 3
        %s159 = smul.addr %s155, 72
        %s160 = sadd.s32 %s158, %s159
        %s161 = smul.addr %s160, 8
        %s162 = scalar_lea.vmem %s0, %s161
        %s163 = smul.u32 8, %s17
      $region24: #{downsample_forward.1} parent=19 // pred_fallthru
        _
      // Predicated region
      $region25: #{downsample_forward.1} parent=19 // pred_check
        %p164 = pneg %p73
      $region26: #{downsample_forward.1} parent=19 // pred_check_branch
        %166 = sbr.rel (%p164) target = $region28
      $region27: #{downsample_forward.1} parent=19 // pred_region
        %s167 = sadd.s32 %s17, 1
        %s168 = smul.u32 8, %s167
        %p169 = scmp.lt.s32.totalorder %s16, 1
        %s170 = scalar_select %p169, %s16, 1
        %p171 = scmp.lt.s32.totalorder %s168, 23
        %s172 = scalar_select %p171, %s168, 23
        %s173 = smul.addr %s172, 3
        %s174 = smul.addr %s170, 72
        %s175 = sadd.s32 %s173, %s174
        %s176 = smul.addr %s175, 8
        %s177 = scalar_lea.vmem %s1, %s176
        %s178 = sadd.s32 %s17, 1
        %s179 = smul.u32 8, %s178
      $region28: #{downsample_forward.1} parent=19 // pred_fallthru
        _
    $region20: #{downsample_forward.1} parent=5 // pred_fallthru
      _
    %p180 = scmp.le.s32.totalorder 1, %s9
    %p181 = scmp.lt.s32.totalorder %s9, 5
    %p182 = pnand %p180, %p181
    %p183 = pneg %p182
    // Predicated region
    $region29: #{downsample_forward.1} parent=5 // pred_check
      _
    $region30: #{downsample_forward.1} parent=5 // pred_check_branch
      %185 = sbr.rel (%p182) target = $region32
    $region31: #{downsample_forward.1} parent=5 // pred_region
      %s186 = ssub.s32 %s9, 1
      %s187 = smul.u32 8, %s19
      %p188 = scmp.lt.s32.totalorder %s18, 1
      %s189 = scalar_select %p188, %s18, 1
      %p190 = scmp.lt.s32.totalorder %s187, 23
      %s191 = scalar_select %p190, %s187, 23
      %s192 = smul.addr %s191, 3
      %s193 = smul.addr %s189, 72
      %s194 = sadd.s32 %s192, %s193
      %s195 = smul.addr %s194, 8
      %s196 = scalar_lea.vmem %s0, %s195
      %p197 = pneg %p49
      %p198 = pneg %p46
      %s199 = sadd.s32 %s19, 1
      %s200 = smul.u32 8, %s199
      %p201 = scmp.lt.s32.totalorder %s18, 1
      %s202 = scalar_select %p201, %s18, 1
      %p203 = scmp.lt.s32.totalorder %s200, 23
      %s204 = scalar_select %p203, %s200, 23
      %s205 = smul.addr %s204, 3
      %s206 = smul.addr %s202, 72
      %s207 = sadd.s32 %s205, %s206
      %s208 = smul.addr %s207, 8
      %s209 = scalar_lea.vmem %s1, %s208
      %p210 = pneg %p79
      %p211 = pneg %p76
      %p212 = pneg %p100
      %p213 = pneg %p97
      %p214 = pneg %p128
      %p215 = pneg %p125
      %s216 = smul.u32 8, %s19
      %p217 = scmp.lt.s32.totalorder %s18, 1
      %s218 = scalar_select %p217, %s18, 1
      %p219 = scmp.lt.s32.totalorder %s216, 15
      %s220 = scalar_select %p219, %s216, 15
      %s221 = smul.addr %s220, 2
      %s222 = smul.addr %s218, 32
      %s223 = sadd.s32 %s221, %s222
      %s224 = smul.addr %s223, 8
      %s225 = scalar_lea.vmem %s3, %s224
      %s226 = smul.u32 8, %s19
      %p227 = scmp.lt.s32.totalorder %s18, 1
      %s228 = scalar_select %p227, %s18, 1
      %p229 = scmp.lt.s32.totalorder %s226, 23
      %s230 = scalar_select %p229, %s226, 23
      %s231 = smul.addr %s230, 3
      %s232 = smul.addr %s228, 72
      %s233 = sadd.s32 %s231, %s232
      %s234 = smul.addr %s233, 8
      %s235 = scalar_lea.vmem %s0, %s234
      %s236 = smul.u32 8, %s19
      %s237 = sadd.s32 %s19, 1
      %s238 = smul.u32 8, %s237
      %p239 = scmp.lt.s32.totalorder %s18, 1
      %s240 = scalar_select %p239, %s18, 1
      %p241 = scmp.lt.s32.totalorder %s238, 23
      %s242 = scalar_select %p241, %s238, 23
      %s243 = smul.addr %s242, 3
      %s244 = smul.addr %s240, 72
      %s245 = sadd.s32 %s243, %s244
      %s246 = smul.addr %s245, 8
      %s247 = scalar_lea.vmem %s1, %s246
      %s248 = sadd.s32 %s19, 1
      %s249 = smul.u32 8, %s248
      %s250 = smul.u32 8, %s19
      %p251 = scmp.lt.s32.totalorder %s18, 1
      %s252 = scalar_select %p251, %s18, 1
      %p253 = scmp.lt.s32.totalorder %s250, 15
      %s254 = scalar_select %p253, %s250, 15
      %s255 = smul.addr %s254, 2
      %s256 = smul.addr %s252, 32
      %s257 = sadd.s32 %s255, %s256
      %s258 = smul.addr %s257, 8
      %s259 = scalar_lea.vmem %s3, %s258
      %s260 = smul.u32 8, %s19
      %v261 = vld [vmem:[%s235] sm:$0xff]
      %v262 = vld [vmem:[%s235 + $0x8] sm:$0xff]
      %v263 = vld [vmem:[%s235 + $0x10] sm:$0x1]
      %v264 = vld [vmem:[%s235 + $0x18] sm:$0xff]
      %v265 = vld [vmem:[%s235 + $0x20] sm:$0xff]
      %v266 = vld [vmem:[%s235 + $0x28] sm:$0x1]
      %v267 = vld [vmem:[%s235 + $0x30] sm:$0xff]
      %v268 = vld [vmem:[%s235 + $0x38] sm:$0xff]
      %v269 = vld [vmem:[%s235 + $0x40] sm:$0x1]
      %v270 = vld [vmem:[%s235 + $0x48] sm:$0xff]
      %v271 = vld [vmem:[%s235 + $0x50] sm:$0xff]
      %v272 = vld [vmem:[%s235 + $0x58] sm:$0x1]
      %v273 = vld [vmem:[%s235 + $0x60] sm:$0xff]
      %v274 = vld [vmem:[%s235 + $0x68] sm:$0xff]
      %v275 = vld [vmem:[%s235 + $0x70] sm:$0x1]
      %v276 = vld [vmem:[%s235 + $0x78] sm:$0xff]
      %v277 = vld [vmem:[%s235 + $0x80] sm:$0xff]
      %v278 = vld [vmem:[%s235 + $0x88] sm:$0x1]
      %v279 = vld [vmem:[%s235 + $0x90] sm:$0xff]
      %v280 = vld [vmem:[%s235 + $0x98] sm:$0xff]
      %v281 = vld [vmem:[%s235 + $0xa0] sm:$0x1]
      %v282 = vld [vmem:[%s235 + $0xa8] sm:$0xff]
      %v283 = vld [vmem:[%s235 + $0xb0] sm:$0xff]
      %v284 = vld [vmem:[%s235 + $0xb8] sm:$0x1]
      %v285 = vld [vmem:[%s247] sm:$0xff]
      %v286 = vld [vmem:[%s247 + $0x8] sm:$0xff]
      %v287 = vld [vmem:[%s247 + $0x10] sm:$0x1]
      %v288 = vld [vmem:[%s2] sm:$0xff]
      %v289 = vld [vmem:[%s2 + $0x8] sm:$0xff]
      %vm314 = vcmask 1046528
      %v315 = vrot.slane %v261, 1
      %v316 = vrot.slane %v262, 1
      %v317 = vsel %vm314, %v315, %v316
      %v318 = vrot.slane %v263, 1
      %v319 = vsel %vm314, %v316, %v318
      %v320 = vrot.slane %v264, 1
      %v321 = vrot.slane %v265, 1
      %v322 = vsel %vm314, %v320, %v321
      %v323 = vrot.slane %v266, 1
      %v324 = vsel %vm314, %v321, %v323
      %v325 = vrot.slane %v267, 1
      %v326 = vrot.slane %v268, 1
      %v327 = vsel %vm314, %v325, %v326
      %v328 = vrot.slane %v269, 1
      %v329 = vsel %vm314, %v326, %v328
      %v330 = vrot.slane %v270, 1
      %v331 = vrot.slane %v271, 1
      %v332 = vsel %vm314, %v330, %v331
      %v333 = vrot.slane %v272, 1
      %v334 = vsel %vm314, %v331, %v333
      %v335 = vrot.slane %v273, 1
      %v336 = vrot.slane %v274, 1
      %v337 = vsel %vm314, %v335, %v336
      %v338 = vrot.slane %v275, 1
      %v339 = vsel %vm314, %v336, %v338
      %v340 = vrot.slane %v276, 1
      %v341 = vrot.slane %v277, 1
      %v342 = vsel %vm314, %v340, %v341
      %v343 = vrot.slane %v278, 1
      %v344 = vsel %vm314, %v341, %v343
      %v345 = vrot.slane %v279, 1
      %v346 = vrot.slane %v280, 1
      %v347 = vsel %vm314, %v345, %v346
      %v348 = vrot.slane %v281, 1
      %v349 = vsel %vm314, %v346, %v348
      %v350 = vrot.slane %v282, 1
      %v351 = vrot.slane %v283, 1
      %v352 = vsel %vm314, %v350, %v351
      %v353 = vrot.slane %v284, 1
      %v354 = vsel %vm314, %v351, %v353
      %s355 = scalar_lea.vmem %s2, 16
      %v356 = vld [vmem:[%s355] sm:$0xff]
      %v357 = vld [vmem:[%s355 + $0x8] sm:$0xff]
      %vm358 = vcmask 130048
      %v359 = vsel %vm358, %v317, 0
      %v361 = vsel %vm358, %v319, 0
      %v363 = vsel %vm358, %v322, 0
      %v365 = vsel %vm358, %v324, 0
      %v367 = vsel %vm358, %v327, 0
      %v369 = vsel %vm358, %v329, 0
      %v371 = vsel %vm358, %v332, 0
      %v373 = vsel %vm358, %v334, 0
      %v375 = vsel %vm358, %v337, 0
      %v377 = vsel %vm358, %v339, 0
      %v379 = vsel %vm358, %v342, 0
      %v381 = vsel %vm358, %v344, 0
      %v383 = vsel %vm358, %v347, 0
      %v385 = vsel %vm358, %v349, 0
      %v387 = vsel %vm358, %v352, 0
      %v389 = vsel %vm358, %v354, 0
      %391 = vmatpush.msra.mxu0 0.0
      %392 = vmatpush.msra.mxu0 0.0
      %393 = vmatpush.msra.mxu0 0.0
      %394 = vmatpush.msra.mxu0 0.0
      %395 = vmatpush.msra.mxu0 0.0
      %396 = vmatpush.msra.mxu0 0.0
      %397 = vmatpush.msra.mxu0 0.0
      %398 = vmatpush.msra.mxu0 0.0
      %399 = vmatpush.msra.mxu0 0.0
      %400 = vmatpush.msra.mxu0 0.0
      %401 = vmatpush.msra.mxu0 0.0
      %402 = vmatpush.msra.mxu0 0.0
      %403 = vmatpush.msra.mxu0 0.0
      %404 = vmatpush.msra.mxu0 0.0
      %405 = vmatpush.msra.mxu0 %v357
      %406 = vmatpush.msra.mxu0 %v356
      %407 = vmatmul.f32.gmra.mxu0 %v359
      %v408 = vpop.f32.mrf.mxu0
      %v409 = vadd.f32 0.0, %v408
      %410 = vmatmul.f32.gmra.mxu0 %v361
      %v411 = vpop.f32.mrf.mxu0
      %v412 = vadd.f32 0.0, %v411
      %413 = vmatmul.f32.gmra.mxu0 %v363
      %v414 = vpop.f32.mrf.mxu0
      %v415 = vadd.f32 0.0, %v414
      %416 = vmatmul.f32.gmra.mxu0 %v365
      %v417 = vpop.f32.mrf.mxu0
      %v418 = vadd.f32 0.0, %v417
      %419 = vmatmul.f32.gmra.mxu0 %v367
      %v420 = vpop.f32.mrf.mxu0
      %v421 = vadd.f32 0.0, %v420
      %422 = vmatmul.f32.gmra.mxu0 %v369
      %v423 = vpop.f32.mrf.mxu0
      %v424 = vadd.f32 0.0, %v423
      %425 = vmatmul.f32.gmra.mxu0 %v371
      %v426 = vpop.f32.mrf.mxu0
      %v427 = vadd.f32 0.0, %v426
      %428 = vmatmul.f32.gmra.mxu0 %v373
      %v429 = vpop.f32.mrf.mxu0
      %v430 = vadd.f32 0.0, %v429
      %431 = vmatmul.f32.gmra.mxu0 %v375
      %v432 = vpop.f32.mrf.mxu0
      %v433 = vadd.f32 0.0, %v432
      %434 = vmatmul.f32.gmra.mxu0 %v377
      %v435 = vpop.f32.mrf.mxu0
      %v436 = vadd.f32 0.0, %v435
      %437 = vmatmul.f32.gmra.mxu0 %v379
      %v438 = vpop.f32.mrf.mxu0
      %v439 = vadd.f32 0.0, %v438
      %440 = vmatmul.f32.gmra.mxu0 %v381
      %v441 = vpop.f32.mrf.mxu0
      %v442 = vadd.f32 0.0, %v441
      %443 = vmatmul.f32.gmra.mxu0 %v383
      %v444 = vpop.f32.mrf.mxu0
      %v445 = vadd.f32 0.0, %v444
      %446 = vmatmul.f32.gmra.mxu0 %v385
      %v447 = vpop.f32.mrf.mxu0
      %v448 = vadd.f32 0.0, %v447
      %449 = vmatmul.f32.gmra.mxu0 %v387
      %v450 = vpop.f32.mrf.mxu0
      %v451 = vadd.f32 0.0, %v450
      %452 = vmatmul.f32.gmra.mxu0 %v389
      %v453 = vpop.f32.mrf.mxu0
      %v454 = vadd.f32 0.0, %v453
      %455 = vdwg.mxu0
      %v456 = vsel %vm358, %v261, 0
      %v458 = vsel %vm358, %v262, 0
      %v460 = vsel %vm358, %v264, 0
      %v462 = vsel %vm358, %v265, 0
      %v464 = vsel %vm358, %v267, 0
      %v466 = vsel %vm358, %v268, 0
      %v468 = vsel %vm358, %v270, 0
      %v470 = vsel %vm358, %v271, 0
      %v472 = vsel %vm358, %v273, 0
      %v474 = vsel %vm358, %v274, 0
      %v476 = vsel %vm358, %v276, 0
      %v478 = vsel %vm358, %v277, 0
      %v480 = vsel %vm358, %v279, 0
      %v482 = vsel %vm358, %v280, 0
      %v484 = vsel %vm358, %v282, 0
      %v486 = vsel %vm358, %v283, 0
      %488 = vmatpush.msra.mxu0 0.0
      %489 = vmatpush.msra.mxu0 0.0
      %490 = vmatpush.msra.mxu0 0.0
      %491 = vmatpush.msra.mxu0 0.0
      %492 = vmatpush.msra.mxu0 0.0
      %493 = vmatpush.msra.mxu0 0.0
      %494 = vmatpush.msra.mxu0 0.0
      %495 = vmatpush.msra.mxu0 0.0
      %496 = vmatpush.msra.mxu0 0.0
      %497 = vmatpush.msra.mxu0 0.0
      %498 = vmatpush.msra.mxu0 0.0
      %499 = vmatpush.msra.mxu0 0.0
      %500 = vmatpush.msra.mxu0 0.0
      %501 = vmatpush.msra.mxu0 0.0
      %502 = vmatpush.msra.mxu0 %v289
      %503 = vmatpush.msra.mxu0 %v288
      %504 = vmatmul.f32.gmra.mxu0 %v456
      %v505 = vpop.f32.mrf.mxu0
      %v506 = vadd.f32 %v409, %v505
      %507 = vmatmul.f32.gmra.mxu0 %v458
      %v508 = vpop.f32.mrf.mxu0
      %v509 = vadd.f32 %v412, %v508
      %510 = vmatmul.f32.gmra.mxu0 %v460
      %v511 = vpop.f32.mrf.mxu0
      %v512 = vadd.f32 %v415, %v511
      %513 = vmatmul.f32.gmra.mxu0 %v462
      %v514 = vpop.f32.mrf.mxu0
      %v515 = vadd.f32 %v418, %v514
      %516 = vmatmul.f32.gmra.mxu0 %v464
      %v517 = vpop.f32.mrf.mxu0
      %v518 = vadd.f32 %v421, %v517
      %519 = vmatmul.f32.gmra.mxu0 %v466
      %v520 = vpop.f32.mrf.mxu0
      %v521 = vadd.f32 %v424, %v520
      %522 = vmatmul.f32.gmra.mxu0 %v468
      %v523 = vpop.f32.mrf.mxu0
      %v524 = vadd.f32 %v427, %v523
      %525 = vmatmul.f32.gmra.mxu0 %v470
      %v526 = vpop.f32.mrf.mxu0
      %v527 = vadd.f32 %v430, %v526
      %528 = vmatmul.f32.gmra.mxu0 %v472
      %v529 = vpop.f32.mrf.mxu0
      %v530 = vadd.f32 %v433, %v529
      %531 = vmatmul.f32.gmra.mxu0 %v474
      %v532 = vpop.f32.mrf.mxu0
      %v533 = vadd.f32 %v436, %v532
      %534 = vmatmul.f32.gmra.mxu0 %v476
      %v535 = vpop.f32.mrf.mxu0
      %v536 = vadd.f32 %v439, %v535
      %537 = vmatmul.f32.gmra.mxu0 %v478
      %v538 = vpop.f32.mrf.mxu0
      %v539 = vadd.f32 %v442, %v538
      %540 = vmatmul.f32.gmra.mxu0 %v480
      %v541 = vpop.f32.mrf.mxu0
      %v542 = vadd.f32 %v445, %v541
      %543 = vmatmul.f32.gmra.mxu0 %v482
      %v544 = vpop.f32.mrf.mxu0
      %v545 = vadd.f32 %v448, %v544
      %546 = vmatmul.f32.gmra.mxu0 %v484
      %v547 = vpop.f32.mrf.mxu0
      %v548 = vadd.f32 %v451, %v547
      %549 = vmatmul.f32.gmra.mxu0 %v486
      %v550 = vpop.f32.mrf.mxu0
      %v551 = vadd.f32 %v454, %v550
      %552 = vdwg.mxu0
      %s553 = scalar_lea.vmem %s2, 32
      %v554 = vld [vmem:[%s553] sm:$0xff]
      %v555 = vld [vmem:[%s553 + $0x8] sm:$0xff]
      %v557 = vsel %vm358, %v285, 0
      %v560 = vsel %vm358, %v286, 0
      %562 = vmatpush.msra.mxu0 0.0
      %563 = vmatpush.msra.mxu0 0.0
      %564 = vmatpush.msra.mxu0 0.0
      %565 = vmatpush.msra.mxu0 0.0
      %566 = vmatpush.msra.mxu0 0.0
      %567 = vmatpush.msra.mxu0 0.0
      %568 = vmatpush.msra.mxu0 0.0
      %569 = vmatpush.msra.mxu0 0.0
      %570 = vmatpush.msra.mxu0 0.0
      %571 = vmatpush.msra.mxu0 0.0
      %572 = vmatpush.msra.mxu0 0.0
      %573 = vmatpush.msra.mxu0 0.0
      %574 = vmatpush.msra.mxu0 0.0
      %575 = vmatpush.msra.mxu0 0.0
      %576 = vmatpush.msra.mxu0 %v555
      %577 = vmatpush.msra.mxu0 %v554
      %578 = vmatmul.f32.gmra.mxu0 %v460
      %v579 = vpop.f32.mrf.mxu0
      %v580 = vadd.f32 0.0, %v579
      %581 = vmatmul.f32.gmra.mxu0 %v462
      %v582 = vpop.f32.mrf.mxu0
      %v583 = vadd.f32 0.0, %v582
      %584 = vmatmul.f32.gmra.mxu0 %v464
      %v585 = vpop.f32.mrf.mxu0
      %v586 = vadd.f32 0.0, %v585
      %587 = vmatmul.f32.gmra.mxu0 %v466
      %v588 = vpop.f32.mrf.mxu0
      %v589 = vadd.f32 0.0, %v588
      %590 = vmatmul.f32.gmra.mxu0 %v468
      %v591 = vpop.f32.mrf.mxu0
      %v592 = vadd.f32 0.0, %v591
      %593 = vmatmul.f32.gmra.mxu0 %v470
      %v594 = vpop.f32.mrf.mxu0
      %v595 = vadd.f32 0.0, %v594
      %596 = vmatmul.f32.gmra.mxu0 %v472
      %v597 = vpop.f32.mrf.mxu0
      %v598 = vadd.f32 0.0, %v597
      %599 = vmatmul.f32.gmra.mxu0 %v474
      %v600 = vpop.f32.mrf.mxu0
      %v601 = vadd.f32 0.0, %v600
      %602 = vmatmul.f32.gmra.mxu0 %v476
      %v603 = vpop.f32.mrf.mxu0
      %v604 = vadd.f32 0.0, %v603
      %605 = vmatmul.f32.gmra.mxu0 %v478
      %v606 = vpop.f32.mrf.mxu0
      %v607 = vadd.f32 0.0, %v606
      %608 = vmatmul.f32.gmra.mxu0 %v480
      %v609 = vpop.f32.mrf.mxu0
      %v610 = vadd.f32 0.0, %v609
      %611 = vmatmul.f32.gmra.mxu0 %v482
      %v612 = vpop.f32.mrf.mxu0
      %v613 = vadd.f32 0.0, %v612
      %614 = vmatmul.f32.gmra.mxu0 %v484
      %v615 = vpop.f32.mrf.mxu0
      %v616 = vadd.f32 0.0, %v615
      %617 = vmatmul.f32.gmra.mxu0 %v486
      %v618 = vpop.f32.mrf.mxu0
      %v619 = vadd.f32 0.0, %v618
      %620 = vmatmul.f32.gmra.mxu0 %v557
      %v621 = vpop.f32.mrf.mxu0
      %v622 = vadd.f32 0.0, %v621
      %623 = vmatmul.f32.gmra.mxu0 %v560
      %v624 = vpop.f32.mrf.mxu0
      %v625 = vadd.f32 0.0, %v624
      %626 = vdwg.mxu0
      %v627 = vadd.f32 %v506, %v580
      %v628 = vadd.f32 %v509, %v583
      %v629 = vadd.f32 %v512, %v586
      %v630 = vadd.f32 %v515, %v589
      %v631 = vadd.f32 %v518, %v592
      %v632 = vadd.f32 %v521, %v595
      %v633 = vadd.f32 %v524, %v598
      %v634 = vadd.f32 %v527, %v601
      %v635 = vadd.f32 %v530, %v604
      %v636 = vadd.f32 %v533, %v607
      %v637 = vadd.f32 %v536, %v610
      %v638 = vadd.f32 %v539, %v613
      %v639 = vadd.f32 %v542, %v616
      %v640 = vadd.f32 %v545, %v619
      %v641 = vadd.f32 %v548, %v622
      %v642 = vadd.f32 %v551, %v625
      %v644 = vrot.slane %v285, 1
      %v645 = vrot.slane %v286, 1
      %v646 = vsel %vm314, %v644, %v645
      %v647 = vrot.slane %v287, 1
      %v648 = vsel %vm314, %v645, %v647
      %s649 = scalar_lea.vmem %s2, 48
      %v650 = vld [vmem:[%s649] sm:$0xff]
      %v651 = vld [vmem:[%s649 + $0x8] sm:$0xff]
      %v652 = vsel %vm358, %v646, 0
      %v654 = vsel %vm358, %v648, 0
      %656 = vmatpush.msra.mxu0 0.0
      %657 = vmatpush.msra.mxu0 0.0
      %658 = vmatpush.msra.mxu0 0.0
      %659 = vmatpush.msra.mxu0 0.0
      %660 = vmatpush.msra.mxu0 0.0
      %661 = vmatpush.msra.mxu0 0.0
      %662 = vmatpush.msra.mxu0 0.0
      %663 = vmatpush.msra.mxu0 0.0
      %664 = vmatpush.msra.mxu0 0.0
      %665 = vmatpush.msra.mxu0 0.0
      %666 = vmatpush.msra.mxu0 0.0
      %667 = vmatpush.msra.mxu0 0.0
      %668 = vmatpush.msra.mxu0 0.0
      %669 = vmatpush.msra.mxu0 0.0
      %670 = vmatpush.msra.mxu0 %v651
      %671 = vmatpush.msra.mxu0 %v650
      %672 = vmatmul.f32.gmra.mxu0 %v363
      %v673 = vpop.f32.mrf.mxu0
      %v674 = vadd.f32 0.0, %v673
      %675 = vmatmul.f32.gmra.mxu0 %v365
      %v676 = vpop.f32.mrf.mxu0
      %v677 = vadd.f32 0.0, %v676
      %678 = vmatmul.f32.gmra.mxu0 %v367
      %v679 = vpop.f32.mrf.mxu0
      %v680 = vadd.f32 0.0, %v679
      %681 = vmatmul.f32.gmra.mxu0 %v369
      %v682 = vpop.f32.mrf.mxu0
      %v683 = vadd.f32 0.0, %v682
      %684 = vmatmul.f32.gmra.mxu0 %v371
      %v685 = vpop.f32.mrf.mxu0
      %v686 = vadd.f32 0.0, %v685
      %687 = vmatmul.f32.gmra.mxu0 %v373
      %v688 = vpop.f32.mrf.mxu0
      %v689 = vadd.f32 0.0, %v688
      %690 = vmatmul.f32.gmra.mxu0 %v375
      %v691 = vpop.f32.mrf.mxu0
      %v692 = vadd.f32 0.0, %v691
      %693 = vmatmul.f32.gmra.mxu0 %v377
      %v694 = vpop.f32.mrf.mxu0
      %v695 = vadd.f32 0.0, %v694
      %696 = vmatmul.f32.gmra.mxu0 %v379
      %v697 = vpop.f32.mrf.mxu0
      %v698 = vadd.f32 0.0, %v697
      %699 = vmatmul.f32.gmra.mxu0 %v381
      %v700 = vpop.f32.mrf.mxu0
      %v701 = vadd.f32 0.0, %v700
      %702 = vmatmul.f32.gmra.mxu0 %v383
      %v703 = vpop.f32.mrf.mxu0
      %v704 = vadd.f32 0.0, %v703
      %705 = vmatmul.f32.gmra.mxu0 %v385
      %v706 = vpop.f32.mrf.mxu0
      %v707 = vadd.f32 0.0, %v706
      %708 = vmatmul.f32.gmra.mxu0 %v387
      %v709 = vpop.f32.mrf.mxu0
      %v710 = vadd.f32 0.0, %v709
      %711 = vmatmul.f32.gmra.mxu0 %v389
      %v712 = vpop.f32.mrf.mxu0
      %v713 = vadd.f32 0.0, %v712
      %714 = vmatmul.f32.gmra.mxu0 %v652
      %v715 = vpop.f32.mrf.mxu0
      %v716 = vadd.f32 0.0, %v715
      %717 = vmatmul.f32.gmra.mxu0 %v654
      %v718 = vpop.f32.mrf.mxu0
      %v719 = vadd.f32 0.0, %v718
      %720 = vdwg.mxu0
      %v721 = vadd.f32 %v627, %v674
      %v722 = vadd.f32 %v628, %v677
      %v723 = vadd.f32 %v629, %v680
      %v724 = vadd.f32 %v630, %v683
      %v725 = vadd.f32 %v631, %v686
      %v726 = vadd.f32 %v632, %v689
      %v727 = vadd.f32 %v633, %v692
      %v728 = vadd.f32 %v634, %v695
      %v729 = vadd.f32 %v635, %v698
      %v730 = vadd.f32 %v636, %v701
      %v731 = vadd.f32 %v637, %v704
      %v732 = vadd.f32 %v638, %v707
      %v733 = vadd.f32 %v639, %v710
      %v734 = vadd.f32 %v640, %v713
      %v735 = vadd.f32 %v641, %v716
      %v736 = vadd.f32 %v642, %v719
      %vm737 = vcmask 64512
      %738 = vst.msk [vmem:[%s259] sm:$0xff] %vm737, %v721
      %739 = vst.msk [vmem:[%s259 + $0x8] sm:$0xff] %vm737, %v722
      %740 = vst.msk [vmem:[%s259 + $0x10] sm:$0xff] %vm737, %v723
      %741 = vst.msk [vmem:[%s259 + $0x18] sm:$0xff] %vm737, %v724
      %742 = vst.msk [vmem:[%s259 + $0x20] sm:$0xff] %vm737, %v725
      %743 = vst.msk [vmem:[%s259 + $0x28] sm:$0xff] %vm737, %v726
      %744 = vst.msk [vmem:[%s259 + $0x30] sm:$0xff] %vm737, %v727
      %745 = vst.msk [vmem:[%s259 + $0x38] sm:$0xff] %vm737, %v728
      %746 = vst.msk [vmem:[%s259 + $0x40] sm:$0xff] %vm737, %v729
      %747 = vst.msk [vmem:[%s259 + $0x48] sm:$0xff] %vm737, %v730
      %748 = vst.msk [vmem:[%s259 + $0x50] sm:$0xff] %vm737, %v731
      %749 = vst.msk [vmem:[%s259 + $0x58] sm:$0xff] %vm737, %v732
      %750 = vst.msk [vmem:[%s259 + $0x60] sm:$0xff] %vm737, %v733
      %751 = vst.msk [vmem:[%s259 + $0x68] sm:$0xff] %vm737, %v734
      %752 = vst.msk [vmem:[%s259 + $0x70] sm:$0xff] %vm737, %v735
      %753 = vst.msk [vmem:[%s259 + $0x78] sm:$0xff] %vm737, %v736
      %s754 = smul.u32 8, %s19
      %p755 = scmp.lt.s32.totalorder %s18, 1
      %s756 = scalar_select %p755, %s18, 1
      %p757 = scmp.lt.s32.totalorder %s754, 15
      %s758 = scalar_select %p757, %s754, 15
      %s759 = smul.addr %s758, 2
      %s760 = smul.addr %s756, 32
      %s761 = sadd.s32 %s759, %s760
      %s762 = smul.addr %s761, 8
      %s763 = scalar_lea.vmem %s3, %s762
      // Predicated region
      $region33: #{downsample_forward.1} parent=31 // pred_check
        %p764 = pneg %p125
      $region34: #{downsample_forward.1} parent=31 // pred_check_branch
        %766 = sbr.rel (%p764) target = $region36
      $region35: #{downsample_forward.1} parent=31 // pred_region
        %s767 = smul.u32 8, %s19
      $region36: #{downsample_forward.1} parent=31 // pred_fallthru
        _
    $region32: #{downsample_forward.1} parent=5 // pred_fallthru
      _
    %p768 = scmp.le.s32.totalorder 2, %s9
    // Predicated region
    $region37: #{downsample_forward.1} parent=5 // pred_check
      %p769 = pneg %p768
    $region38: #{downsample_forward.1} parent=5 // pred_check_branch
      %771 = sbr.rel (%p769) target = $region40
    $region39: #{downsample_forward.1} parent=5 // pred_region
      %s772 = ssub.s32 %s9, 2
      // Predicated region
      $region41: #{downsample_forward.1} parent=39 // pred_check
        %p773 = pneg %p131
      $region42: #{downsample_forward.1} parent=39 // pred_check_branch
        %775 = sbr.rel (%p773) target = $region44
      $region43: #{downsample_forward.1} parent=39 // pred_region
        %s776 = smul.u32 8, %s21
        %p777 = scmp.lt.s32.totalorder %s20, 1
        %s778 = scalar_select %p777, %s20, 1
        %p779 = scmp.lt.s32.totalorder %s776, 15
        %s780 = scalar_select %p779, %s776, 15
        %s781 = smul.addr %s780, 2
        %s782 = smul.addr %s778, 32
        %s783 = sadd.s32 %s781, %s782
        %s784 = smul.addr %s783, 8
        %s785 = scalar_lea.vmem %s3, %s784
      $region44: #{downsample_forward.1} parent=39 // pred_fallthru
        _
    $region40: #{downsample_forward.1} parent=5 // pred_fallthru
      _
  $region6: #{downsample_forward.1} parent=0 // loop_footer
    %s13 = sadd.s32 1, %s9
  $region7: #{downsample_forward.1} parent=0 // loop_footer_branch
    %8 = sbr.rel target = $region3
  $region8: #{downsample_forward.1} parent=0 // loop_exit
    _

</llo_original>
